<compile_context>
chip_gen: v5e
topology: v5e:2x2
jax: 0.10.0
libtpu: 0.0.40
codegen_flags: <defaults>
</compile_context>

<pallas_src>
import functools

import jax
import jax.numpy as jnp
from jax.experimental import pallas as pl
from jax.experimental.pallas import tpu as pltpu

_LANE = 128
_TARGET_TILE_M = 2048


# --------------------------------------------------------------------------
# planning helpers
# --------------------------------------------------------------------------
def _round_up(x, m):
    return (x + m - 1) // m * m


def _vmem_capacity_bytes():
    try:
        return int(pltpu.get_tpu_info().vmem_capacity_bytes)
    except Exception:
        return 64 * 1024 * 1024  # v7x per-core floor


def _plan_tiles(m, bytes_per_col):
    """Pick tile_m (lane axis), padded M, and an explicit VMEM limit."""
    cap = _vmem_capacity_bytes()
    vmem_limit = int(min(3 * cap // 4, 96 * 1024 * 1024))
    budget = vmem_limit // 2                       # headroom for double-buffering
    max_tile = max(budget // (2 * bytes_per_col), _LANE)
    tile = min(_TARGET_TILE_M, max_tile)
    tile = max((tile // _LANE) * _LANE, _LANE)     # multiple of 128
    tile = min(tile, _round_up(m, _LANE))
    m_pad = _round_up(m, tile)
    return tile, m_pad, vmem_limit


def _pad_cols(a, m_pad):
    m = a.shape[1]
    return a if m == m_pad else jnp.pad(a, ((0, 0), (0, m_pad - m)))


def _compiler_params(vmem_limit):
    return pltpu.CompilerParams(dimension_semantics=("parallel",),
                                vmem_limit_bytes=vmem_limit)


# --------------------------------------------------------------------------
# in-kernel math
# --------------------------------------------------------------------------
def _gelu(x):
    # TODO(synk): PyTorch nn.GELU uses exact erf; tanh approximation used here
    # (erf has no guaranteed Mosaic lowering).
    c = 0.7978845608028654  # sqrt(2/pi)
    return 0.5 * x * (1.0 + jnp.tanh(c * (x + 0.044715 * x * x * x)))


def _relu(x):
    return jnp.maximum(x, 0.0)


# --------------------------------------------------------------------------
# Pallas kernels (all operate on (C, M) slabs, M on the lane axis)
# --------------------------------------------------------------------------
def _matmul_bias_act_kernel(act, x_ref, w_ref, b_ref, o_ref):
    # o = act(W @ x + b); x: (Cin, tm), W: (Cout, Cin), b: (Cout, 1)
    y = jnp.dot(w_ref[...], x_ref[...], preferred_element_type=jnp.float32)
    o_ref[...] = act(y + b_ref[...])


def _matmul_stats_kernel(x_ref, w_ref, stats_ref):
    # per-tile partial (sum, sum-of-squares) of y = W @ x, per output channel;
    # y is never written back to HBM.
    y = jnp.dot(w_ref[...], x_ref[...], preferred_element_type=jnp.float32)
    s1 = jnp.sum(y, axis=1, keepdims=True)
    s2 = jnp.sum(y * y, axis=1, keepdims=True)
    stats_ref[...] = jnp.concatenate([s1, s2], axis=1)[None]   # (1, Cout, 2)


def _add_stats_kernel(a_ref, b_ref, stats_ref):
    z = a_ref[...] + b_ref[...]
    s1 = jnp.sum(z, axis=1, keepdims=True)
    s2 = jnp.sum(z * z, axis=1, keepdims=True)
    stats_ref[...] = jnp.concatenate([s1, s2], axis=1)[None]   # (1, C, 2)


def _add_scale_shift_relu_kernel(a_ref, b_ref, s_ref, t_ref, o_ref):
    o_ref[...] = jnp.maximum(
        (a_ref[...] + b_ref[...]) * s_ref[...] + t_ref[...], 0.0)


# --------------------------------------------------------------------------
# pallas_call launchers
# --------------------------------------------------------------------------
def matmul_bias_act(x2d, w, b, act):
    """act(W @ x + b) over a (Cin, M) slab; returns (Cout, M)."""
    cin, m = x2d.shape
    cout = w.shape[0]
    tile, m_pad, vmem_limit = _plan_tiles(m, 4 * (cin + cout))
    xp = _pad_cols(x2d, m_pad)
    out = pl.pallas_call(
        functools.partial(_matmul_bias_act_kernel, act),
        out_shape=jax.ShapeDtypeStruct((cout, m_pad), jnp.float32),
        grid_spec=pltpu.PrefetchScalarGridSpec(
            num_scalar_prefetch=0,
            grid=(m_pad // tile,),
            in_specs=[pl.BlockSpec((cin, tile), lambda i: (0, i)),
                      pl.BlockSpec((cout, cin), lambda i: (0, 0)),
                      pl.BlockSpec((cout, 1), lambda i: (0, 0))],
            out_specs=pl.BlockSpec((cout, tile), lambda i: (0, i))),
        compiler_params=_compiler_params(vmem_limit),
    )(xp, w, b)
    return out[:, :m]


def matmul_batch_stats(x2d, w):
    """Per-output-channel (sum, sum_sq) of W @ x without materializing y."""
    cin, m = x2d.shape
    cout = w.shape[0]
    tile, m_pad, vmem_limit = _plan_tiles(m, 4 * cin)
    xp = _pad_cols(x2d, m_pad)
    nt = m_pad // tile
    partial = pl.pallas_call(
        _matmul_stats_kernel,
        out_shape=jax.ShapeDtypeStruct((nt, cout, 2), jnp.float32),
        grid_spec=pltpu.PrefetchScalarGridSpec(
            num_scalar_prefetch=0,
            grid=(nt,),
            in_specs=[pl.BlockSpec((cin, tile), lambda i: (0, i)),
                      pl.BlockSpec((cout, cin), lambda i: (0, 0))],
            out_specs=pl.BlockSpec((1, cout, 2), lambda i: (i, 0, 0))),
        compiler_params=_compiler_params(vmem_limit),
    )(xp, w)
    s = jnp.sum(partial, axis=0)               # reduce per-tile partials
    return s[:, 0], s[:, 1]


def add_batch_stats(a2d, b2d):
    """Per-channel (sum, sum_sq) of (a + b) without materializing the sum."""
    c, m = a2d.shape
    tile, m_pad, vmem_limit = _plan_tiles(m, 4 * 2 * c)
    ap = _pad_cols(a2d, m_pad)
    bp = _pad_cols(b2d, m_pad)
    nt = m_pad // tile
    partial = pl.pallas_call(
        _add_stats_kernel,
        out_shape=jax.ShapeDtypeStruct((nt, c, 2), jnp.float32),
        grid_spec=pltpu.PrefetchScalarGridSpec(
            num_scalar_prefetch=0,
            grid=(nt,),
            in_specs=[pl.BlockSpec((c, tile), lambda i: (0, i)),
                      pl.BlockSpec((c, tile), lambda i: (0, i))],
            out_specs=pl.BlockSpec((1, c, 2), lambda i: (i, 0, 0))),
        compiler_params=_compiler_params(vmem_limit),
    )(ap, bp)
    s = jnp.sum(partial, axis=0)
    return s[:, 0], s[:, 1]


def add_scale_shift_relu(a2d, b2d, scale, shift):
    """relu(scale * (a + b) + shift), per-channel scale/shift of shape (C, 1)."""
    c, m = a2d.shape
    tile, m_pad, vmem_limit = _plan_tiles(m, 4 * 3 * c)
    ap = _pad_cols(a2d, m_pad)
    bp = _pad_cols(b2d, m_pad)
    out = pl.pallas_call(
        _add_scale_shift_relu_kernel,
        out_shape=jax.ShapeDtypeStruct((c, m_pad), jnp.float32),
        grid_spec=pltpu.PrefetchScalarGridSpec(
            num_scalar_prefetch=0,
            grid=(m_pad // tile,),
            in_specs=[pl.BlockSpec((c, tile), lambda i: (0, i)),
                      pl.BlockSpec((c, tile), lambda i: (0, i)),
                      pl.BlockSpec((c, 1), lambda i: (0, 0)),
                      pl.BlockSpec((c, 1), lambda i: (0, 0))],
            out_specs=pl.BlockSpec((c, tile), lambda i: (0, i))),
        compiler_params=_compiler_params(vmem_limit),
    )(ap, bp, scale, shift)
    return out[:, :m]


def _bn_scale_shift(s1, s2, n, gamma, beta, eps=1e-5):
    # training-mode BatchNorm batch statistics (biased variance, like PyTorch)
    mean = s1 / n
    var = jnp.maximum(s2 / n - mean * mean, 0.0)   # guard against cancellation
    inv = jax.lax.rsqrt(var + eps)
    scale = gamma * inv
    shift = beta - mean * scale
    return scale, shift


# --------------------------------------------------------------------------
# Freq_Fusion forward
# --------------------------------------------------------------------------
def freq_fusion_forward(x, params):
    """x: (B, 2*dim, H, W) f32 NCHW -> (B, 2*dim, H, W)."""
    (w1, b1, w2, b2, wf, gamma_f, beta_f, gamma_o, beta_o) = params
    b, c0, h, w = x.shape
    dim = c0 // 2

    # --- stage A: conv_init_1 / conv_init_2 (1x1 conv + bias + GELU) -------
    # block-diagonal weight turns the two per-half convs into one matmul.
    w1m = w1.reshape(dim, dim).astype(jnp.float32)
    w2m = w2.reshape(dim, dim).astype(jnp.float32)
    wa = jnp.zeros((c0, c0), jnp.float32)
    wa = wa.at[:dim, :dim].set(w1m).at[dim:, dim:].set(w2m)
    ba = jnp.concatenate([b1, b2]).reshape(c0, 1).astype(jnp.float32)

    x2d = jnp.transpose(x, (1, 0, 2, 3)).reshape(c0, b * h * w)
    x0_2d = matmul_bias_act(x2d.astype(jnp.float32), wa, ba, _gelu)

    # --- stage B: FourierUnit = rfft2 -> 1x1 conv -> BN -> ReLU -> irfft2 --
    # TODO(synk): rfft2 / irfft2 have no Pallas primitive; computed with jnp.fft.
    x0_4d = x0_2d.reshape(c0, b, h, w)
    ff = jnp.fft.rfft2(x0_4d, norm="ortho")                 # (c0, B, H, Wr) c64
    wr = ff.shape[-1]
    spec = jnp.stack([ff.real, ff.imag], axis=1)            # (c0, 2, B, H, Wr)
    spec2d = spec.reshape(2 * c0, b * h * wr).astype(jnp.float32)

    wf2d = wf.reshape(2 * c0, 2 * c0).astype(jnp.float32)   # (Cout, Cin)
    nf = jnp.float32(b * h * wr)
    s1, s2 = matmul_batch_stats(spec2d, wf2d)
    scale_f, shift_f = _bn_scale_shift(s1, s2, nf, gamma_f, beta_f)
    wf_fold = wf2d * scale_f[:, None]                       # fold BN scale into W
    y2d = matmul_bias_act(spec2d, wf_fold, shift_f.reshape(-1, 1), _relu)

    y5 = y2d.reshape(c0, 2, b, h, wr)
    y_c = jax.lax.complex(y5[:, 0], y5[:, 1])               # (c0, B, H, Wr)
    ffc = jnp.fft.irfft2(y_c, s=(h, w), norm="ortho")       # (c0, B, H, W)
    ffc2d = ffc.reshape(c0, b * h * w).astype(jnp.float32)

    # --- stage C: residual add + BatchNorm + ReLU ---------------------------
    n0 = jnp.float32(b * h * w)
    t1, t2 = add_batch_stats(ffc2d, x0_2d)
    scale_o, shift_o = _bn_scale_shift(t1, t2, n0, gamma_o, beta_o)
    out2d = add_scale_shift_relu(ffc2d, x0_2d,
                                 scale_o.reshape(-1, 1), shift_o.reshape(-1, 1))

    return jnp.transpose(out2d.reshape(c0, b, h, w), (1, 0, 2, 3))


if __name__ == "__main__":
    key = jax.random.PRNGKey(0)
    ks = jax.random.split(key, 8)

    B, dim, H, W = 2, 4, 16, 16
    C0 = 2 * dim                                   # Freq_Fusion input channels

    x = jax.random.normal(ks[0], (B, C0, H, W), dtype=jnp.float32)

    # Deterministic synthetic parameters mirroring Freq_Fusion.__init__:
    w1 = 0.2 * jax.random.normal(ks[1], (dim, dim, 1, 1), jnp.float32)
    b1 = 0.1 * jax.random.normal(ks[2], (dim,), jnp.float32)
    w2 = 0.2 * jax.random.normal(ks[3], (dim, dim, 1, 1), jnp.float32)
    b2 = 0.1 * jax.random.normal(ks[4], (dim,), jnp.float32)
    wf = 0.1 * jax.random.normal(ks[5], (2 * C0, 2 * C0, 1, 1), jnp.float32)
    gamma_f = jnp.ones((2 * C0,), jnp.float32)     # FourierUnit BN weight/bias
    beta_f = jnp.zeros((2 * C0,), jnp.float32)
    gamma_o = jnp.ones((C0,), jnp.float32)         # outer BN weight/bias
    beta_o = jnp.zeros((C0,), jnp.float32)

    params = (w1, b1, w2, b2, wf, gamma_f, beta_f, gamma_o, beta_o)

    out = jax.jit(freq_fusion_forward)(x, params)
    jax.block_until_ready(out)
    assert out.shape == (B, C0, H, W), out.shape
    print("KERNEL_OK")
</pallas_src>

<mosaic_0001>
module attributes {stable_mosaic.version = 11 : i64} {
  func.func @_matmul_bias_act_kernel(%arg0: i32, %arg1: memref<8x512xf32, #tpu.memory_space<vmem>>, %arg2: memref<8x8xf32, #tpu.memory_space<vmem>>, %arg3: memref<8x1xf32, #tpu.memory_space<vmem>>, %arg4: memref<8x512xf32, #tpu.memory_space<vmem>>) attributes {dimension_semantics = [#tpu.dimension_semantics<parallel>], iteration_bounds = array<i64: 1>, scalar_prefetch = 0 : i64, scratch_operands = 0 : i64, tpu.core_type = #tpu.core_type<tc>, window_params = [{transform_indices = @transform_0, window_bounds = array<i64: 8, 512>}, {pipeline_mode = #tpu.pipeline_mode<synchronous>, transform_indices = @transform_1, window_bounds = array<i64: 8, 8>}, {pipeline_mode = #tpu.pipeline_mode<synchronous>, transform_indices = @transform_2, window_bounds = array<i64: 8, 1>}, {transform_indices = @transform_3, window_bounds = array<i64: 8, 512>}]} {
    %c0 = arith.constant 0 : index
    %c0_0 = arith.constant 0 : index
    %0 = vector.load %arg2[%c0, %c0_0] : memref<8x8xf32, #tpu.memory_space<vmem>>, vector<8x8xf32>
    %c0_1 = arith.constant 0 : index
    %c0_2 = arith.constant 0 : index
    %1 = vector.load %arg1[%c0_1, %c0_2] : memref<8x512xf32, #tpu.memory_space<vmem>>, vector<8x512xf32>
    %cst = arith.constant dense<0.000000e+00> : vector<8x512xf32>
    %2 = tpu.matmul %0, %1, %cst {dimension_numbers = #tpu.dot_dimension_numbers<[1], [0], [0], [1], [0, 0, 1, 1], [], []>} : vector<8x8xf32>, vector<8x512xf32>, vector<8x512xf32> -> vector<8x512xf32>
    %c0_3 = arith.constant 0 : index
    %c0_4 = arith.constant 0 : index
    %3 = vector.load %arg3[%c0_3, %c0_4] : memref<8x1xf32, #tpu.memory_space<vmem>>, vector<8x1xf32>
    %4 = vector.broadcast %3 : vector<8x1xf32> to vector<8x512xf32>
    %5 = arith.addf %2, %4 : vector<8x512xf32>
    %cst_5 = arith.constant 5.000000e-01 : f32
    %6 = vector.broadcast %cst_5 : f32 to vector<8x512xf32>
    %7 = arith.mulf %6, %5 : vector<8x512xf32>
    %cst_6 = arith.constant 4.471500e-02 : f32
    %8 = vector.broadcast %cst_6 : f32 to vector<8x512xf32>
    %9 = arith.mulf %8, %5 : vector<8x512xf32>
    %10 = arith.mulf %9, %5 : vector<8x512xf32>
    %11 = arith.mulf %10, %5 : vector<8x512xf32>
    %12 = arith.addf %5, %11 : vector<8x512xf32>
    %cst_7 = arith.constant 0.797884583 : f32
    %13 = vector.broadcast %cst_7 : f32 to vector<8x512xf32>
    %14 = arith.mulf %13, %12 : vector<8x512xf32>
    %15 = math.tanh %14 : vector<8x512xf32>
    %cst_8 = arith.constant 1.000000e+00 : f32
    %16 = vector.broadcast %cst_8 : f32 to vector<8x512xf32>
    %17 = arith.addf %16, %15 : vector<8x512xf32>
    %18 = arith.mulf %7, %17 : vector<8x512xf32>
    %c0_9 = arith.constant 0 : index
    %c0_10 = arith.constant 0 : index
    %19 = vector.load %arg4[%c0_9, %c0_10] : memref<8x512xf32, #tpu.memory_space<vmem>>, vector<8x512xf32>
    tpu.vector_store %arg4[%c0_9, %c0_10], %18 {strides = array<i32>} : memref<8x512xf32, #tpu.memory_space<vmem>>, vector<8x512xf32>,
    return
  }
  func.func @transform_0(%arg0: i32) -> (i32, i32) {
    %c0_i32 = arith.constant 0 : i32
    %c0_i32_0 = arith.constant 0 : i32
    return %c0_i32, %arg0 : i32, i32
  }
  func.func @transform_1(%arg0: i32) -> (i32, i32) {
    %c0_i32 = arith.constant 0 : i32
    %c0_i32_0 = arith.constant 0 : i32
    %c0_i32_1 = arith.constant 0 : i32
    return %c0_i32, %c0_i32_0 : i32, i32
  }
  func.func @transform_2(%arg0: i32) -> (i32, i32) {
    %c0_i32 = arith.constant 0 : i32
    %c0_i32_0 = arith.constant 0 : i32
    %c0_i32_1 = arith.constant 0 : i32
    return %c0_i32, %c0_i32_0 : i32, i32
  }
  func.func @transform_3(%arg0: i32) -> (i32, i32) {
    %c0_i32 = arith.constant 0 : i32
    %c0_i32_0 = arith.constant 0 : i32
    return %c0_i32, %arg0 : i32, i32
  }
}

module attributes {stable_mosaic.version = 11 : i64} {
  func.func @_matmul_stats_kernel(%arg0: i32, %arg1: memref<16x384xf32, #tpu.memory_space<vmem>>, %arg2: memref<16x16xf32, #tpu.memory_space<vmem>>, %arg3: memref<1x16x2xf32, #tpu.memory_space<vmem>>) attributes {dimension_semantics = [#tpu.dimension_semantics<parallel>], iteration_bounds = array<i64: 1>, scalar_prefetch = 0 : i64, scratch_operands = 0 : i64, tpu.core_type = #tpu.core_type<tc>, window_params = [{transform_indices = @transform_0, window_bounds = array<i64: 16, 384>}, {pipeline_mode = #tpu.pipeline_mode<synchronous>, transform_indices = @transform_1, window_bounds = array<i64: 16, 16>}, {transform_indices = @transform_2, window_bounds = array<i64: 1, 16, 2>}]} {
    %c0 = arith.constant 0 : index
    %c0_0 = arith.constant 0 : index
    %0 = vector.load %arg2[%c0, %c0_0] : memref<16x16xf32, #tpu.memory_space<vmem>>, vector<16x16xf32>
    %c0_1 = arith.constant 0 : index
    %c0_2 = arith.constant 0 : index
    %1 = vector.load %arg1[%c0_1, %c0_2] : memref<16x384xf32, #tpu.memory_space<vmem>>, vector<16x384xf32>
    %cst = arith.constant dense<0.000000e+00> : vector<16x384xf32>
    %2 = tpu.matmul %0, %1, %cst {dimension_numbers = #tpu.dot_dimension_numbers<[1], [0], [0], [1], [0, 0, 1, 1], [], []>} : vector<16x16xf32>, vector<16x384xf32>, vector<16x384xf32> -> vector<16x384xf32>
    %cst_3 = arith.constant dense<0.000000e+00> : vector<16xf32>
    %3 = vector.multi_reduction <add>, %2, %cst_3 [1] : vector<16x384xf32> to vector<16xf32>
    %4 = vector.shape_cast %3 : vector<16xf32> to vector<16x1xf32>
    %5 = arith.mulf %2, %2 : vector<16x384xf32>
    %cst_4 = arith.constant dense<0.000000e+00> : vector<16xf32>
    %6 = vector.multi_reduction <add>, %5, %cst_4 [1] : vector<16x384xf32> to vector<16xf32>
    %7 = vector.shape_cast %6 : vector<16xf32> to vector<16x1xf32>
    %8 = tpu.concatenate %4, %7 in 1 : vector<16x1xf32>, vector<16x1xf32> -> vector<16x2xf32>
    %9 = vector.shape_cast %8 : vector<16x2xf32> to vector<1x16x2xf32>
    %c0_5 = arith.constant 0 : index
    %c0_6 = arith.constant 0 : index
    %c0_7 = arith.constant 0 : index
    %10 = vector.load %arg3[%c0_5, %c0_6, %c0_7] : memref<1x16x2xf32, #tpu.memory_space<vmem>>, vector<1x16x2xf32>
    tpu.vector_store %arg3[%c0_5, %c0_6, %c0_7], %9 {strides = array<i32>} : memref<1x16x2xf32, #tpu.memory_space<vmem>>, vector<1x16x2xf32>,
    return
  }
  func.func @transform_0(%arg0: i32) -> (i32, i32) {
    %c0_i32 = arith.constant 0 : i32
    %c0_i32_0 = arith.constant 0 : i32
    return %c0_i32, %arg0 : i32, i32
  }
  func.func @transform_1(%arg0: i32) -> (i32, i32) {
    %c0_i32 = arith.constant 0 : i32
    %c0_i32_0 = arith.constant 0 : i32
    %c0_i32_1 = arith.constant 0 : i32
    return %c0_i32, %c0_i32_0 : i32, i32
  }
  func.func @transform_2(%arg0: i32) -> (i32, i32, i32) {
    %c0_i32 = arith.constant 0 : i32
    %c0_i32_0 = arith.constant 0 : i32
    %c0_i32_1 = arith.constant 0 : i32
    return %arg0, %c0_i32, %c0_i32_0 : i32, i32, i32
  }
}

module attributes {stable_mosaic.version = 11 : i64} {
  func.func @_matmul_bias_act_kernel(%arg0: i32, %arg1: memref<16x384xf32, #tpu.memory_space<vmem>>, %arg2: memref<16x16xf32, #tpu.memory_space<vmem>>, %arg3: memref<16x1xf32, #tpu.memory_space<vmem>>, %arg4: memref<16x384xf32, #tpu.memory_space<vmem>>) attributes {dimension_semantics = [#tpu.dimension_semantics<parallel>], iteration_bounds = array<i64: 1>, scalar_prefetch = 0 : i64, scratch_operands = 0 : i64, tpu.core_type = #tpu.core_type<tc>, window_params = [{transform_indices = @transform_0, window_bounds = array<i64: 16, 384>}, {pipeline_mode = #tpu.pipeline_mode<synchronous>, transform_indices = @transform_1, window_bounds = array<i64: 16, 16>}, {pipeline_mode = #tpu.pipeline_mode<synchronous>, transform_indices = @transform_2, window_bounds = array<i64: 16, 1>}, {transform_indices = @transform_3, window_bounds = array<i64: 16, 384>}]} {
    %c0 = arith.constant 0 : index
    %c0_0 = arith.constant 0 : index
    %0 = vector.load %arg2[%c0, %c0_0] : memref<16x16xf32, #tpu.memory_space<vmem>>, vector<16x16xf32>
    %c0_1 = arith.constant 0 : index
    %c0_2 = arith.constant 0 : index
    %1 = vector.load %arg1[%c0_1, %c0_2] : memref<16x384xf32, #tpu.memory_space<vmem>>, vector<16x384xf32>
    %cst = arith.constant dense<0.000000e+00> : vector<16x384xf32>
    %2 = tpu.matmul %0, %1, %cst {dimension_numbers = #tpu.dot_dimension_numbers<[1], [0], [0], [1], [0, 0, 1, 1], [], []>} : vector<16x16xf32>, vector<16x384xf32>, vector<16x384xf32> -> vector<16x384xf32>
    %c0_3 = arith.constant 0 : index
    %c0_4 = arith.constant 0 : index
    %3 = vector.load %arg3[%c0_3, %c0_4] : memref<16x1xf32, #tpu.memory_space<vmem>>, vector<16x1xf32>
    %4 = vector.broadcast %3 : vector<16x1xf32> to vector<16x384xf32>
    %5 = arith.addf %2, %4 : vector<16x384xf32>
    %cst_5 = arith.constant 0.000000e+00 : f32
    %6 = vector.broadcast %cst_5 : f32 to vector<16x384xf32>
    %7 = arith.maximumf %5, %6 : vector<16x384xf32>
    %c0_6 = arith.constant 0 : index
    %c0_7 = arith.constant 0 : index
    %8 = vector.load %arg4[%c0_6, %c0_7] : memref<16x384xf32, #tpu.memory_space<vmem>>, vector<16x384xf32>
    tpu.vector_store %arg4[%c0_6, %c0_7], %7 {strides = array<i32>} : memref<16x384xf32, #tpu.memory_space<vmem>>, vector<16x384xf32>,
    return
  }
  func.func @transform_0(%arg0: i32) -> (i32, i32) {
    %c0_i32 = arith.constant 0 : i32
    %c0_i32_0 = arith.constant 0 : i32
    return %c0_i32, %arg0 : i32, i32
  }
  func.func @transform_1(%arg0: i32) -> (i32, i32) {
    %c0_i32 = arith.constant 0 : i32
    %c0_i32_0 = arith.constant 0 : i32
    %c0_i32_1 = arith.constant 0 : i32
    return %c0_i32, %c0_i32_0 : i32, i32
  }
  func.func @transform_2(%arg0: i32) -> (i32, i32) {
    %c0_i32 = arith.constant 0 : i32
    %c0_i32_0 = arith.constant 0 : i32
    %c0_i32_1 = arith.constant 0 : i32
    return %c0_i32, %c0_i32_0 : i32, i32
  }
  func.func @transform_3(%arg0: i32) -> (i32, i32) {
    %c0_i32 = arith.constant 0 : i32
    %c0_i32_0 = arith.constant 0 : i32
    return %c0_i32, %arg0 : i32, i32
  }
}

module attributes {stable_mosaic.version = 11 : i64} {
  func.func @_add_stats_kernel(%arg0: i32, %arg1: memref<8x512xf32, #tpu.memory_space<vmem>>, %arg2: memref<8x512xf32, #tpu.memory_space<vmem>>, %arg3: memref<1x8x2xf32, #tpu.memory_space<vmem>>) attributes {dimension_semantics = [#tpu.dimension_semantics<parallel>], iteration_bounds = array<i64: 1>, scalar_prefetch = 0 : i64, scratch_operands = 0 : i64, tpu.core_type = #tpu.core_type<tc>, window_params = [{transform_indices = @transform_0, window_bounds = array<i64: 8, 512>}, {transform_indices = @transform_1, window_bounds = array<i64: 8, 512>}, {transform_indices = @transform_2, window_bounds = array<i64: 1, 8, 2>}]} {
    %c0 = arith.constant 0 : index
    %c0_0 = arith.constant 0 : index
    %0 = vector.load %arg1[%c0, %c0_0] : memref<8x512xf32, #tpu.memory_space<vmem>>, vector<8x512xf32>
    %c0_1 = arith.constant 0 : index
    %c0_2 = arith.constant 0 : index
    %1 = vector.load %arg2[%c0_1, %c0_2] : memref<8x512xf32, #tpu.memory_space<vmem>>, vector<8x512xf32>
    %2 = arith.addf %0, %1 : vector<8x512xf32>
    %cst = arith.constant dense<0.000000e+00> : vector<8xf32>
    %3 = vector.multi_reduction <add>, %2, %cst [1] : vector<8x512xf32> to vector<8xf32>
    %4 = vector.shape_cast %3 : vector<8xf32> to vector<8x1xf32>
    %5 = arith.mulf %2, %2 : vector<8x512xf32>
    %cst_3 = arith.constant dense<0.000000e+00> : vector<8xf32>
    %6 = vector.multi_reduction <add>, %5, %cst_3 [1] : vector<8x512xf32> to vector<8xf32>
    %7 = vector.shape_cast %6 : vector<8xf32> to vector<8x1xf32>
    %8 = tpu.concatenate %4, %7 in 1 : vector<8x1xf32>, vector<8x1xf32> -> vector<8x2xf32>
    %9 = vector.shape_cast %8 : vector<8x2xf32> to vector<1x8x2xf32>
    %c0_4 = arith.constant 0 : index
    %c0_5 = arith.constant 0 : index
    %c0_6 = arith.constant 0 : index
    %10 = vector.load %arg3[%c0_4, %c0_5, %c0_6] : memref<1x8x2xf32, #tpu.memory_space<vmem>>, vector<1x8x2xf32>
    tpu.vector_store %arg3[%c0_4, %c0_5, %c0_6], %9 {strides = array<i32>} : memref<1x8x2xf32, #tpu.memory_space<vmem>>, vector<1x8x2xf32>,
    return
  }
  func.func @transform_0(%arg0: i32) -> (i32, i32) {
    %c0_i32 = arith.constant 0 : i32
    %c0_i32_0 = arith.constant 0 : i32
    return %c0_i32, %arg0 : i32, i32
  }
  func.func @transform_1(%arg0: i32) -> (i32, i32) {
    %c0_i32 = arith.constant 0 : i32
    %c0_i32_0 = arith.constant 0 : i32
    return %c0_i32, %arg0 : i32, i32
  }
  func.func @transform_2(%arg0: i32) -> (i32, i32, i32) {
    %c0_i32 = arith.constant 0 : i32
    %c0_i32_0 = arith.constant 0 : i32
    %c0_i32_1 = arith.constant 0 : i32
    return %arg0, %c0_i32, %c0_i32_0 : i32, i32, i32
  }
}

module attributes {stable_mosaic.version = 11 : i64} {
  func.func @_add_scale_shift_relu_kernel(%arg0: i32, %arg1: memref<8x512xf32, #tpu.memory_space<vmem>>, %arg2: memref<8x512xf32, #tpu.memory_space<vmem>>, %arg3: memref<8x1xf32, #tpu.memory_space<vmem>>, %arg4: memref<8x1xf32, #tpu.memory_space<vmem>>, %arg5: memref<8x512xf32, #tpu.memory_space<vmem>>) attributes {dimension_semantics = [#tpu.dimension_semantics<parallel>], iteration_bounds = array<i64: 1>, scalar_prefetch = 0 : i64, scratch_operands = 0 : i64, tpu.core_type = #tpu.core_type<tc>, window_params = [{transform_indices = @transform_0, window_bounds = array<i64: 8, 512>}, {transform_indices = @transform_1, window_bounds = array<i64: 8, 512>}, {pipeline_mode = #tpu.pipeline_mode<synchronous>, transform_indices = @transform_2, window_bounds = array<i64: 8, 1>}, {pipeline_mode = #tpu.pipeline_mode<synchronous>, transform_indices = @transform_3, window_bounds = array<i64: 8, 1>}, {transform_indices = @transform_4, window_bounds = array<i64: 8, 512>}]} {
    %c0 = arith.constant 0 : index
    %c0_0 = arith.constant 0 : index
    %0 = vector.load %arg1[%c0, %c0_0] : memref<8x512xf32, #tpu.memory_space<vmem>>, vector<8x512xf32>
    %c0_1 = arith.constant 0 : index
    %c0_2 = arith.constant 0 : index
    %1 = vector.load %arg2[%c0_1, %c0_2] : memref<8x512xf32, #tpu.memory_space<vmem>>, vector<8x512xf32>
    %2 = arith.addf %0, %1 : vector<8x512xf32>
    %c0_3 = arith.constant 0 : index
    %c0_4 = arith.constant 0 : index
    %3 = vector.load %arg3[%c0_3, %c0_4] : memref<8x1xf32, #tpu.memory_space<vmem>>, vector<8x1xf32>
    %4 = vector.broadcast %3 : vector<8x1xf32> to vector<8x512xf32>
    %5 = arith.mulf %2, %4 : vector<8x512xf32>
    %c0_5 = arith.constant 0 : index
    %c0_6 = arith.constant 0 : index
    %6 = vector.load %arg4[%c0_5, %c0_6] : memref<8x1xf32, #tpu.memory_space<vmem>>, vector<8x1xf32>
    %7 = vector.broadcast %6 : vector<8x1xf32> to vector<8x512xf32>
    %8 = arith.addf %5, %7 : vector<8x512xf32>
    %cst = arith.constant 0.000000e+00 : f32
    %9 = vector.broadcast %cst : f32 to vector<8x512xf32>
    %10 = arith.maximumf %8, %9 : vector<8x512xf32>
    %c0_7 = arith.constant 0 : index
    %c0_8 = arith.constant 0 : index
    %11 = vector.load %arg5[%c0_7, %c0_8] : memref<8x512xf32, #tpu.memory_space<vmem>>, vector<8x512xf32>
    tpu.vector_store %arg5[%c0_7, %c0_8], %10 {strides = array<i32>} : memref<8x512xf32, #tpu.memory_space<vmem>>, vector<8x512xf32>,
    return
  }
  func.func @transform_0(%arg0: i32) -> (i32, i32) {
    %c0_i32 = arith.constant 0 : i32
    %c0_i32_0 = arith.constant 0 : i32
    return %c0_i32, %arg0 : i32, i32
  }
  func.func @transform_1(%arg0: i32) -> (i32, i32) {
    %c0_i32 = arith.constant 0 : i32
    %c0_i32_0 = arith.constant 0 : i32
    return %c0_i32, %arg0 : i32, i32
  }
  func.func @transform_2(%arg0: i32) -> (i32, i32) {
    %c0_i32 = arith.constant 0 : i32
    %c0_i32_0 = arith.constant 0 : i32
    %c0_i32_1 = arith.constant 0 : i32
    return %c0_i32, %c0_i32_0 : i32, i32
  }
  func.func @transform_3(%arg0: i32) -> (i32, i32) {
    %c0_i32 = arith.constant 0 : i32
    %c0_i32_0 = arith.constant 0 : i32
    %c0_i32_1 = arith.constant 0 : i32
    return %c0_i32, %c0_i32_0 : i32, i32
  }
  func.func @transform_4(%arg0: i32) -> (i32, i32) {
    %c0_i32 = arith.constant 0 : i32
    %c0_i32_0 = arith.constant 0 : i32
    return %c0_i32, %arg0 : i32, i32
  }
}

</mosaic_0001>

<llo_original>
// kernel: reverse.1
$region0: #{reverse.1}
  %s0 = inlined_call_operand.vmem [shape: f32[8,2,16,7], index: 0, kind: input, shape index: {}]
  %s1 = inlined_call_operand.vmem [shape: f32[8,2,16,7], index: 1, kind: output, shape index: {}]
  $region1: #{reverse.1} parent=0
    #allocation0 [shape = 'u8[131072]{0}', space=vmem, size = 0x20000, scoped, tag = 'operand span for operand 0']
    #allocation1 [shape = 'u8[65536]{0}', space=vmem, size = 0x10000, scoped, tag = 'operand span for operand 1']
    %s2 = scalar_lea.vmem [#allocation0], 8
    // Predicated region
    $region2: #{reverse.1} parent=1 // pred_check
      _
    $region3: #{reverse.1} parent=1 // pred_check_branch
      %4 = sbr.rel (0) target = $region5
    $region4: #{reverse.1} parent=1 // pred_region
      // Predicated region
      $region6: #{reverse.1} parent=4 // pred_check
        _
      $region7: #{reverse.1} parent=4 // pred_check_branch
        %6 = sbr.rel (0) target = $region9
      $region8: #{reverse.1} parent=4 // pred_region
        // Predicated region
        $region21: #{reverse.1} parent=8 // pred_check
          _
        $region22: #{reverse.1} parent=8 // pred_check_branch
          %52 = sbr.rel (0) target = $region24
        $region23: #{reverse.1} parent=8 // pred_region
          loop: start=0, step=1, limit=1
          $region25: #{reverse.1} parent=23 // loop_pre_header
            _
          $region26: #{reverse.1} parent=23 // loop_header
            %s54 = sphi 0, %s58
            %p55 = scmp.ge.s32.totalorder %s54, 1
            %s59 = sphi %s0, %s0
            %s60 = sphi %s2, %s2
          $region27: #{reverse.1} parent=23 // loop_header_branch
            %57 = sbr.rel (%p55) target = $region31
          $region28: #{reverse.1} parent=23 // loop_body
            %v61 = vld [vmem:[%s59] sm:$0xff]
            %62 = vst [vmem:[%s60] sm:$0xff] %v61
            %v63 = vld [vmem:[%s59 + $0x8] sm:$0xff]
            %64 = vst [vmem:[%s60 + $0x10] sm:$0xff] %v63
            %v65 = vld [vmem:[%s59 + $0x10] sm:$0xff]
            %66 = vst [vmem:[%s60 + $0x20] sm:$0xff] %v65
            %v67 = vld [vmem:[%s59 + $0x18] sm:$0xff]
            %68 = vst [vmem:[%s60 + $0x30] sm:$0xff] %v67
            %v69 = vld [vmem:[%s59 + $0x20] sm:$0xff]
            %70 = vst [vmem:[%s60 + $0x40] sm:$0xff] %v69
            %v71 = vld [vmem:[%s59 + $0x28] sm:$0xff]
            %72 = vst [vmem:[%s60 + $0x50] sm:$0xff] %v71
            %v73 = vld [vmem:[%s59 + $0x30] sm:$0xff]
            %74 = vst [vmem:[%s60 + $0x60] sm:$0xff] %v73
            %v75 = vld [vmem:[%s59 + $0x38] sm:$0xff]
            %76 = vst [vmem:[%s60 + $0x70] sm:$0xff] %v75
            %v77 = vld [vmem:[%s59 + $0x40] sm:$0xff]
            %78 = vst [vmem:[%s60 + $0x80] sm:$0xff] %v77
            %v79 = vld [vmem:[%s59 + $0x48] sm:$0xff]
            %80 = vst [vmem:[%s60 + $0x90] sm:$0xff] %v79
            %v81 = vld [vmem:[%s59 + $0x50] sm:$0xff]
            %82 = vst [vmem:[%s60 + $0xa0] sm:$0xff] %v81
            %v83 = vld [vmem:[%s59 + $0x58] sm:$0xff]
            %84 = vst [vmem:[%s60 + $0xb0] sm:$0xff] %v83
            %v85 = vld [vmem:[%s59 + $0x60] sm:$0xff]
            %86 = vst [vmem:[%s60 + $0xc0] sm:$0xff] %v85
            %v87 = vld [vmem:[%s59 + $0x68] sm:$0xff]
            %88 = vst [vmem:[%s60 + $0xd0] sm:$0xff] %v87
            %v89 = vld [vmem:[%s59 + $0x70] sm:$0xff]
            %90 = vst [vmem:[%s60 + $0xe0] sm:$0xff] %v89
            %v91 = vld [vmem:[%s59 + $0x78] sm:$0xff]
            %92 = vst [vmem:[%s60 + $0xf0] sm:$0xff] %v91
          $region29: #{reverse.1} parent=23 // loop_footer
            %s58 = sadd.s32 1, %s54
          $region30: #{reverse.1} parent=23 // loop_footer_branch
            %53 = sbr.rel target = $region26
          $region31: #{reverse.1} parent=23 // loop_exit
            _
        $region24: #{reverse.1} parent=8 // pred_fallthru
          _
        // Predicated region
        $region32: #{reverse.1} parent=8 // pred_check
          _
        $region33: #{reverse.1} parent=8 // pred_check_branch
          %94 = sbr.rel target = $region35
        $region34: #{reverse.1} parent=8 // pred_region
          _
        $region35: #{reverse.1} parent=8 // pred_fallthru
          _
      $region9: #{reverse.1} parent=4 // pred_fallthru
        _
      // Predicated region
      $region10: #{reverse.1} parent=4 // pred_check
        _
      $region11: #{reverse.1} parent=4 // pred_check_branch
        %8 = sbr.rel target = $region13
      $region12: #{reverse.1} parent=4 // pred_region
        %s10 = ssub.s32 256, 1
        loop: start=0, step=1, limit=1
        $region14: #{reverse.1} parent=12 // loop_pre_header
          _
        $region15: #{reverse.1} parent=12 // loop_header
          %s12 = sphi 0, %s16
          %p13 = scmp.ge.s32.totalorder %s12, 1
          %s17 = sphi %s0, %s0
          %s18 = sphi %s2, %s2
        $region16: #{reverse.1} parent=12 // loop_header_branch
          %15 = sbr.rel (%p13) target = $region20
        $region17: #{reverse.1} parent=12 // loop_body
          %v19 = vld [vmem:[%s17] sm:%s10]
          %20 = vst [vmem:[%s18] sm:%s10] %v19
          %v21 = vld [vmem:[%s17 + $0x8] sm:%s10]
          %22 = vst [vmem:[%s18 + $0x10] sm:%s10] %v21
          %v23 = vld [vmem:[%s17 + $0x10] sm:%s10]
          %24 = vst [vmem:[%s18 + $0x20] sm:%s10] %v23
          %v25 = vld [vmem:[%s17 + $0x18] sm:%s10]
          %26 = vst [vmem:[%s18 + $0x30] sm:%s10] %v25
          %v27 = vld [vmem:[%s17 + $0x20] sm:%s10]
          %28 = vst [vmem:[%s18 + $0x40] sm:%s10] %v27
          %v29 = vld [vmem:[%s17 + $0x28] sm:%s10]
          %30 = vst [vmem:[%s18 + $0x50] sm:%s10] %v29
          %v31 = vld [vmem:[%s17 + $0x30] sm:%s10]
          %32 = vst [vmem:[%s18 + $0x60] sm:%s10] %v31
          %v33 = vld [vmem:[%s17 + $0x38] sm:%s10]
          %34 = vst [vmem:[%s18 + $0x70] sm:%s10] %v33
          %v35 = vld [vmem:[%s17 + $0x40] sm:%s10]
          %36 = vst [vmem:[%s18 + $0x80] sm:%s10] %v35
          %v37 = vld [vmem:[%s17 + $0x48] sm:%s10]
          %38 = vst [vmem:[%s18 + $0x90] sm:%s10] %v37
          %v39 = vld [vmem:[%s17 + $0x50] sm:%s10]
          %40 = vst [vmem:[%s18 + $0xa0] sm:%s10] %v39
          %v41 = vld [vmem:[%s17 + $0x58] sm:%s10]
          %42 = vst [vmem:[%s18 + $0xb0] sm:%s10] %v41
          %v43 = vld [vmem:[%s17 + $0x60] sm:%s10]
          %44 = vst [vmem:[%s18 + $0xc0] sm:%s10] %v43
          %v45 = vld [vmem:[%s17 + $0x68] sm:%s10]
          %46 = vst [vmem:[%s18 + $0xd0] sm:%s10] %v45
          %v47 = vld [vmem:[%s17 + $0x70] sm:%s10]
          %48 = vst [vmem:[%s18 + $0xe0] sm:%s10] %v47
          %v49 = vld [vmem:[%s17 + $0x78] sm:%s10]
          %50 = vst [vmem:[%s18 + $0xf0] sm:%s10] %v49
        $region18: #{reverse.1} parent=12 // loop_footer
          %s16 = sadd.s32 1, %s12
        $region19: #{reverse.1} parent=12 // loop_footer_branch
          %11 = sbr.rel target = $region15
        $region20: #{reverse.1} parent=12 // loop_exit
          _
      $region13: #{reverse.1} parent=4 // pred_fallthru
        _
    $region5: #{reverse.1} parent=1 // pred_fallthru
      _
    %95 = vnop
    %s96 = scalar_lea.vmem [#allocation0], 7
    %v97 = vld [vmem:[%s96] ss:$-1 sm:$0xff]
    %v98 = vrot.slane %v97, 1
    %99 = vst [vmem:[#allocation1] sm:$0xff] %v98
    %s100 = scalar_lea.vmem [#allocation0], 8
    %s101 = scalar_lea.vmem %s100, 7 [#allocation0]
    %v102 = vld [vmem:[%s101] ss:$-1 sm:$0xff]
    %v103 = vrot.slane %v102, 1
    %v104 = vlaneseq
    %v105 = vshrl.u32 %v104, 7
    %vm106 = vcmp.lt.s32.totalorder %v105, 7
    %107 = vst.msk [vmem:[#allocation1] sm:$0xff] %vm106, %v103
    %s108 = scalar_lea.vmem [#allocation1], 8
    %s109 = scalar_lea.vmem [#allocation0], 16
    %s110 = scalar_lea.vmem %s109, 7 [#allocation0]
    %v111 = vld [vmem:[%s110] ss:$-1 sm:$0xff]
    %v112 = vrot.slane %v111, 1
    %113 = vst [vmem:[%s108] sm:$0xff] %v112
    %s114 = scalar_lea.vmem %s109, 8 [#allocation0]
    %s115 = scalar_lea.vmem %s114, 7 [#allocation0]
    %v116 = vld [vmem:[%s115] ss:$-1 sm:$0xff]
    %v117 = vrot.slane %v116, 1
    %v118 = vlaneseq
    %v119 = vshrl.u32 %v118, 7
    %vm120 = vcmp.lt.s32.totalorder %v119, 7
    %121 = vst.msk [vmem:[%s108] sm:$0xff] %vm120, %v117
    %s122 = scalar_lea.vmem [#allocation1], 16
    %s123 = scalar_lea.vmem [#allocation0], 32
    %s124 = scalar_lea.vmem %s123, 7 [#allocation0]
    %v125 = vld [vmem:[%s124] ss:$-1 sm:$0xff]
    %v126 = vrot.slane %v125, 1
    %127 = vst [vmem:[%s122] sm:$0xff] %v126
    %s128 = scalar_lea.vmem %s123, 8 [#allocation0]
    %s129 = scalar_lea.vmem %s128, 7 [#allocation0]
    %v130 = vld [vmem:[%s129] ss:$-1 sm:$0xff]
    %v131 = vrot.slane %v130, 1
    %v132 = vlaneseq
    %v133 = vshrl.u32 %v132, 7
    %vm134 = vcmp.lt.s32.totalorder %v133, 7
    %135 = vst.msk [vmem:[%s122] sm:$0xff] %vm134, %v131
    %s136 = scalar_lea.vmem [#allocation1], 24
    %s137 = scalar_lea.vmem [#allocation0], 48
    %s138 = scalar_lea.vmem %s137, 7 [#allocation0]
    %v139 = vld [vmem:[%s138] ss:$-1 sm:$0xff]
    %v140 = vrot.slane %v139, 1
    %141 = vst [vmem:[%s136] sm:$0xff] %v140
    %s142 = scalar_lea.vmem %s137, 8 [#allocation0]
    %s143 = scalar_lea.vmem %s142, 7 [#allocation0]
    %v144 = vld [vmem:[%s143] ss:$-1 sm:$0xff]
    %v145 = vrot.slane %v144, 1
    %v146 = vlaneseq
    %v147 = vshrl.u32 %v146, 7
    %vm148 = vcmp.lt.s32.totalorder %v147, 7
    %149 = vst.msk [vmem:[%s136] sm:$0xff] %vm148, %v145
    %s150 = scalar_lea.vmem [#allocation1], 32
    %s151 = scalar_lea.vmem [#allocation0], 64
    %s152 = scalar_lea.vmem %s151, 7 [#allocation0]
    %v153 = vld [vmem:[%s152] ss:$-1 sm:$0xff]
    %v154 = vrot.slane %v153, 1
    %155 = vst [vmem:[%s150] sm:$0xff] %v154
    %s156 = scalar_lea.vmem %s151, 8 [#allocation0]
    %s157 = scalar_lea.vmem %s156, 7 [#allocation0]
    %v158 = vld [vmem:[%s157] ss:$-1 sm:$0xff]
    %v159 = vrot.slane %v158, 1
    %v160 = vlaneseq
    %v161 = vshrl.u32 %v160, 7
    %vm162 = vcmp.lt.s32.totalorder %v161, 7
    %163 = vst.msk [vmem:[%s150] sm:$0xff] %vm162, %v159
    %s164 = scalar_lea.vmem [#allocation1], 40
    %s165 = scalar_lea.vmem [#allocation0], 80
    %s166 = scalar_lea.vmem %s165, 7 [#allocation0]
    %v167 = vld [vmem:[%s166] ss:$-1 sm:$0xff]
    %v168 = vrot.slane %v167, 1
    %169 = vst [vmem:[%s164] sm:$0xff] %v168
    %s170 = scalar_lea.vmem %s165, 8 [#allocation0]
    %s171 = scalar_lea.vmem %s170, 7 [#allocation0]
    %v172 = vld [vmem:[%s171] ss:$-1 sm:$0xff]
    %v173 = vrot.slane %v172, 1
    %v174 = vlaneseq
    %v175 = vshrl.u32 %v174, 7
    %vm176 = vcmp.lt.s32.totalorder %v175, 7
    %177 = vst.msk [vmem:[%s164] sm:$0xff] %vm176, %v173
    %s178 = scalar_lea.vmem [#allocation1], 48
    %s179 = scalar_lea.vmem [#allocation0], 96
    %s180 = scalar_lea.vmem %s179, 7 [#allocation0]
    %v181 = vld [vmem:[%s180] ss:$-1 sm:$0xff]
    %v182 = vrot.slane %v181, 1
    %183 = vst [vmem:[%s178] sm:$0xff] %v182
    %s184 = scalar_lea.vmem %s179, 8 [#allocation0]
    %s185 = scalar_lea.vmem %s184, 7 [#allocation0]
    %v186 = vld [vmem:[%s185] ss:$-1 sm:$0xff]
    %v187 = vrot.slane %v186, 1
    %v188 = vlaneseq
    %v189 = vshrl.u32 %v188, 7
    %vm190 = vcmp.lt.s32.totalorder %v189, 7
    %191 = vst.msk [vmem:[%s178] sm:$0xff] %vm190, %v187
    %s192 = scalar_lea.vmem [#allocation1], 56
    %s193 = scalar_lea.vmem [#allocation0], 112
    %s194 = scalar_lea.vmem %s193, 7 [#allocation0]
    %v195 = vld [vmem:[%s194] ss:$-1 sm:$0xff]
    %v196 = vrot.slane %v195, 1
    %197 = vst [vmem:[%s192] sm:$0xff] %v196
    %s198 = scalar_lea.vmem %s193, 8 [#allocation0]
    %s199 = scalar_lea.vmem %s198, 7 [#allocation0]
    %v200 = vld [vmem:[%s199] ss:$-1 sm:$0xff]
    %v201 = vrot.slane %v200, 1
    %v202 = vlaneseq
    %v203 = vshrl.u32 %v202, 7
    %vm204 = vcmp.lt.s32.totalorder %v203, 7
    %205 = vst.msk [vmem:[%s192] sm:$0xff] %vm204, %v201
    %s206 = scalar_lea.vmem [#allocation1], 64
    %s207 = scalar_lea.vmem [#allocation0], 128
    %s208 = scalar_lea.vmem %s207, 7 [#allocation0]
    %v209 = vld [vmem:[%s208] ss:$-1 sm:$0xff]
    %v210 = vrot.slane %v209, 1
    %211 = vst [vmem:[%s206] sm:$0xff] %v210
    %s212 = scalar_lea.vmem %s207, 8 [#allocation0]
    %s213 = scalar_lea.vmem %s212, 7 [#allocation0]
    %v214 = vld [vmem:[%s213] ss:$-1 sm:$0xff]
    %v215 = vrot.slane %v214, 1
    %v216 = vlaneseq
    %v217 = vshrl.u32 %v216, 7
    %vm218 = vcmp.lt.s32.totalorder %v217, 7
    %219 = vst.msk [vmem:[%s206] sm:$0xff] %vm218, %v215
    %s220 = scalar_lea.vmem [#allocation1], 72
    %s221 = scalar_lea.vmem [#allocation0], 144
    %s222 = scalar_lea.vmem %s221, 7 [#allocation0]
    %v223 = vld [vmem:[%s222] ss:$-1 sm:$0xff]
    %v224 = vrot.slane %v223, 1
    %225 = vst [vmem:[%s220] sm:$0xff] %v224
    %s226 = scalar_lea.vmem %s221, 8 [#allocation0]
    %s227 = scalar_lea.vmem %s226, 7 [#allocation0]
    %v228 = vld [vmem:[%s227] ss:$-1 sm:$0xff]
    %v229 = vrot.slane %v228, 1
    %v230 = vlaneseq
    %v231 = vshrl.u32 %v230, 7
    %vm232 = vcmp.lt.s32.totalorder %v231, 7
    %233 = vst.msk [vmem:[%s220] sm:$0xff] %vm232, %v229
    %s234 = scalar_lea.vmem [#allocation1], 80
    %s235 = scalar_lea.vmem [#allocation0], 160
    %s236 = scalar_lea.vmem %s235, 7 [#allocation0]
    %v237 = vld [vmem:[%s236] ss:$-1 sm:$0xff]
    %v238 = vrot.slane %v237, 1
    %239 = vst [vmem:[%s234] sm:$0xff] %v238
    %s240 = scalar_lea.vmem %s235, 8 [#allocation0]
    %s241 = scalar_lea.vmem %s240, 7 [#allocation0]
    %v242 = vld [vmem:[%s241] ss:$-1 sm:$0xff]
    %v243 = vrot.slane %v242, 1
    %v244 = vlaneseq
    %v245 = vshrl.u32 %v244, 7
    %vm246 = vcmp.lt.s32.totalorder %v245, 7
    %247 = vst.msk [vmem:[%s234] sm:$0xff] %vm246, %v243
    %s248 = scalar_lea.vmem [#allocation1], 88
    %s249 = scalar_lea.vmem [#allocation0], 176
    %s250 = scalar_lea.vmem %s249, 7 [#allocation0]
    %v251 = vld [vmem:[%s250] ss:$-1 sm:$0xff]
    %v252 = vrot.slane %v251, 1
    %253 = vst [vmem:[%s248] sm:$0xff] %v252
    %s254 = scalar_lea.vmem %s249, 8 [#allocation0]
    %s255 = scalar_lea.vmem %s254, 7 [#allocation0]
    %v256 = vld [vmem:[%s255] ss:$-1 sm:$0xff]
    %v257 = vrot.slane %v256, 1
    %v258 = vlaneseq
    %v259 = vshrl.u32 %v258, 7
    %vm260 = vcmp.lt.s32.totalorder %v259, 7
    %261 = vst.msk [vmem:[%s248] sm:$0xff] %vm260, %v257
    %s262 = scalar_lea.vmem [#allocation1], 96
    %s263 = scalar_lea.vmem [#allocation0], 192
    %s264 = scalar_lea.vmem %s263, 7 [#allocation0]
    %v265 = vld [vmem:[%s264] ss:$-1 sm:$0xff]
    %v266 = vrot.slane %v265, 1
    %267 = vst [vmem:[%s262] sm:$0xff] %v266
    %s268 = scalar_lea.vmem %s263, 8 [#allocation0]
    %s269 = scalar_lea.vmem %s268, 7 [#allocation0]
    %v270 = vld [vmem:[%s269] ss:$-1 sm:$0xff]
    %v271 = vrot.slane %v270, 1
    %v272 = vlaneseq
    %v273 = vshrl.u32 %v272, 7
    %vm274 = vcmp.lt.s32.totalorder %v273, 7
    %275 = vst.msk [vmem:[%s262] sm:$0xff] %vm274, %v271
    %s276 = scalar_lea.vmem [#allocation1], 104
    %s277 = scalar_lea.vmem [#allocation0], 208
    %s278 = scalar_lea.vmem %s277, 7 [#allocation0]
    %v279 = vld [vmem:[%s278] ss:$-1 sm:$0xff]
    %v280 = vrot.slane %v279, 1
    %281 = vst [vmem:[%s276] sm:$0xff] %v280
    %s282 = scalar_lea.vmem %s277, 8 [#allocation0]
    %s283 = scalar_lea.vmem %s282, 7 [#allocation0]
    %v284 = vld [vmem:[%s283] ss:$-1 sm:$0xff]
    %v285 = vrot.slane %v284, 1
    %v286 = vlaneseq
    %v287 = vshrl.u32 %v286, 7
    %vm288 = vcmp.lt.s32.totalorder %v287, 7
    %289 = vst.msk [vmem:[%s276] sm:$0xff] %vm288, %v285
    %s290 = scalar_lea.vmem [#allocation1], 112
    %s291 = scalar_lea.vmem [#allocation0], 224
    %s292 = scalar_lea.vmem %s291, 7 [#allocation0]
    %v293 = vld [vmem:[%s292] ss:$-1 sm:$0xff]
    %v294 = vrot.slane %v293, 1
    %295 = vst [vmem:[%s290] sm:$0xff] %v294
    %s296 = scalar_lea.vmem %s291, 8 [#allocation0]
    %s297 = scalar_lea.vmem %s296, 7 [#allocation0]
    %v298 = vld [vmem:[%s297] ss:$-1 sm:$0xff]
    %v299 = vrot.slane %v298, 1
    %v300 = vlaneseq
    %v301 = vshrl.u32 %v300, 7
    %vm302 = vcmp.lt.s32.totalorder %v301, 7
    %303 = vst.msk [vmem:[%s290] sm:$0xff] %vm302, %v299
    %s304 = scalar_lea.vmem [#allocation1], 120
    %s305 = scalar_lea.vmem [#allocation0], 240
    %s306 = scalar_lea.vmem %s305, 7 [#allocation0]
    %v307 = vld [vmem:[%s306] ss:$-1 sm:$0xff]
    %v308 = vrot.slane %v307, 1
    %309 = vst [vmem:[%s304] sm:$0xff] %v308
    %s310 = scalar_lea.vmem %s305, 8 [#allocation0]
    %s311 = scalar_lea.vmem %s310, 7 [#allocation0]
    %v312 = vld [vmem:[%s311] ss:$-1 sm:$0xff]
    %v313 = vrot.slane %v312, 1
    %v314 = vlaneseq
    %v315 = vshrl.u32 %v314, 7
    %vm316 = vcmp.lt.s32.totalorder %v315, 7
    %317 = vst.msk [vmem:[%s304] sm:$0xff] %vm316, %v313
    // Predicated region
    $region36: #{reverse.1} parent=1 // pred_check
      _
    $region37: #{reverse.1} parent=1 // pred_check_branch
      %319 = sbr.rel (0) target = $region39
    $region38: #{reverse.1} parent=1 // pred_region
      // Predicated region
      $region40: #{reverse.1} parent=38 // pred_check
        _
      $region41: #{reverse.1} parent=38 // pred_check_branch
        %321 = sbr.rel (0) target = $region43
      $region42: #{reverse.1} parent=38 // pred_region
        // Predicated region
        $region55: #{reverse.1} parent=42 // pred_check
          _
        $region56: #{reverse.1} parent=42 // pred_check_branch
          %367 = sbr.rel (0) target = $region58
        $region57: #{reverse.1} parent=42 // pred_region
          loop: start=0, step=1, limit=1
          $region59: #{reverse.1} parent=57 // loop_pre_header
            _
          $region60: #{reverse.1} parent=57 // loop_header
            %s369 = sphi 0, %s373
            %p370 = scmp.ge.s32.totalorder %s369, 1
            %s374 = sphi [#allocation1], [#allocation1]
            %s375 = sphi %s1, %s1
          $region61: #{reverse.1} parent=57 // loop_header_branch
            %372 = sbr.rel (%p370) target = $region65
          $region62: #{reverse.1} parent=57 // loop_body
            %v376 = vld [vmem:[%s374] sm:$0xff]
            %377 = vst [vmem:[%s375] sm:$0xff] %v376
            %v378 = vld [vmem:[%s374 + $0x8] sm:$0xff]
            %379 = vst [vmem:[%s375 + $0x8] sm:$0xff] %v378
            %v380 = vld [vmem:[%s374 + $0x10] sm:$0xff]
            %381 = vst [vmem:[%s375 + $0x10] sm:$0xff] %v380
            %v382 = vld [vmem:[%s374 + $0x18] sm:$0xff]
            %383 = vst [vmem:[%s375 + $0x18] sm:$0xff] %v382
            %v384 = vld [vmem:[%s374 + $0x20] sm:$0xff]
            %385 = vst [vmem:[%s375 + $0x20] sm:$0xff] %v384
            %v386 = vld [vmem:[%s374 + $0x28] sm:$0xff]
            %387 = vst [vmem:[%s375 + $0x28] sm:$0xff] %v386
            %v388 = vld [vmem:[%s374 + $0x30] sm:$0xff]
            %389 = vst [vmem:[%s375 + $0x30] sm:$0xff] %v388
            %v390 = vld [vmem:[%s374 + $0x38] sm:$0xff]
            %391 = vst [vmem:[%s375 + $0x38] sm:$0xff] %v390
            %v392 = vld [vmem:[%s374 + $0x40] sm:$0xff]
            %393 = vst [vmem:[%s375 + $0x40] sm:$0xff] %v392
            %v394 = vld [vmem:[%s374 + $0x48] sm:$0xff]
            %395 = vst [vmem:[%s375 + $0x48] sm:$0xff] %v394
            %v396 = vld [vmem:[%s374 + $0x50] sm:$0xff]
            %397 = vst [vmem:[%s375 + $0x50] sm:$0xff] %v396
            %v398 = vld [vmem:[%s374 + $0x58] sm:$0xff]
            %399 = vst [vmem:[%s375 + $0x58] sm:$0xff] %v398
            %v400 = vld [vmem:[%s374 + $0x60] sm:$0xff]
            %401 = vst [vmem:[%s375 + $0x60] sm:$0xff] %v400
            %v402 = vld [vmem:[%s374 + $0x68] sm:$0xff]
            %403 = vst [vmem:[%s375 + $0x68] sm:$0xff] %v402
            %v404 = vld [vmem:[%s374 + $0x70] sm:$0xff]
            %405 = vst [vmem:[%s375 + $0x70] sm:$0xff] %v404
            %v406 = vld [vmem:[%s374 + $0x78] sm:$0xff]
            %407 = vst [vmem:[%s375 + $0x78] sm:$0xff] %v406
          $region63: #{reverse.1} parent=57 // loop_footer
            %s373 = sadd.s32 1, %s369
          $region64: #{reverse.1} parent=57 // loop_footer_branch
            %368 = sbr.rel target = $region60
          $region65: #{reverse.1} parent=57 // loop_exit
            _
        $region58: #{reverse.1} parent=42 // pred_fallthru
          _
        // Predicated region
        $region66: #{reverse.1} parent=42 // pred_check
          _
        $region67: #{reverse.1} parent=42 // pred_check_branch
          %409 = sbr.rel target = $region69
        $region68: #{reverse.1} parent=42 // pred_region
          _
        $region69: #{reverse.1} parent=42 // pred_fallthru
          _
      $region43: #{reverse.1} parent=38 // pred_fallthru
        _
      // Predicated region
      $region44: #{reverse.1} parent=38 // pred_check
        _
      $region45: #{reverse.1} parent=38 // pred_check_branch
        %323 = sbr.rel target = $region47
      $region46: #{reverse.1} parent=38 // pred_region
        %s325 = ssub.s32 256, 1
        loop: start=0, step=1, limit=1
        $region48: #{reverse.1} parent=46 // loop_pre_header
          _
        $region49: #{reverse.1} parent=46 // loop_header
          %s327 = sphi 0, %s331
          %p328 = scmp.ge.s32.totalorder %s327, 1
          %s332 = sphi [#allocation1], [#allocation1]
          %s333 = sphi %s1, %s1
        $region50: #{reverse.1} parent=46 // loop_header_branch
          %330 = sbr.rel (%p328) target = $region54
        $region51: #{reverse.1} parent=46 // loop_body
          %v334 = vld [vmem:[%s332] sm:%s325]
          %335 = vst [vmem:[%s333] sm:%s325] %v334
          %v336 = vld [vmem:[%s332 + $0x8] sm:%s325]
          %337 = vst [vmem:[%s333 + $0x8] sm:%s325] %v336
          %v338 = vld [vmem:[%s332 + $0x10] sm:%s325]
          %339 = vst [vmem:[%s333 + $0x10] sm:%s325] %v338
          %v340 = vld [vmem:[%s332 + $0x18] sm:%s325]
          %341 = vst [vmem:[%s333 + $0x18] sm:%s325] %v340
          %v342 = vld [vmem:[%s332 + $0x20] sm:%s325]
          %343 = vst [vmem:[%s333 + $0x20] sm:%s325] %v342
          %v344 = vld [vmem:[%s332 + $0x28] sm:%s325]
          %345 = vst [vmem:[%s333 + $0x28] sm:%s325] %v344
          %v346 = vld [vmem:[%s332 + $0x30] sm:%s325]
          %347 = vst [vmem:[%s333 + $0x30] sm:%s325] %v346
          %v348 = vld [vmem:[%s332 + $0x38] sm:%s325]
          %349 = vst [vmem:[%s333 + $0x38] sm:%s325] %v348
          %v350 = vld [vmem:[%s332 + $0x40] sm:%s325]
          %351 = vst [vmem:[%s333 + $0x40] sm:%s325] %v350
          %v352 = vld [vmem:[%s332 + $0x48] sm:%s325]
          %353 = vst [vmem:[%s333 + $0x48] sm:%s325] %v352
          %v354 = vld [vmem:[%s332 + $0x50] sm:%s325]
          %355 = vst [vmem:[%s333 + $0x50] sm:%s325] %v354
          %v356 = vld [vmem:[%s332 + $0x58] sm:%s325]
          %357 = vst [vmem:[%s333 + $0x58] sm:%s325] %v356
          %v358 = vld [vmem:[%s332 + $0x60] sm:%s325]
          %359 = vst [vmem:[%s333 + $0x60] sm:%s325] %v358
          %v360 = vld [vmem:[%s332 + $0x68] sm:%s325]
          %361 = vst [vmem:[%s333 + $0x68] sm:%s325] %v360
          %v362 = vld [vmem:[%s332 + $0x70] sm:%s325]
          %363 = vst [vmem:[%s333 + $0x70] sm:%s325] %v362
          %v364 = vld [vmem:[%s332 + $0x78] sm:%s325]
          %365 = vst [vmem:[%s333 + $0x78] sm:%s325] %v364
        $region52: #{reverse.1} parent=46 // loop_footer
          %s331 = sadd.s32 1, %s327
        $region53: #{reverse.1} parent=46 // loop_footer_branch
          %326 = sbr.rel target = $region49
        $region54: #{reverse.1} parent=46 // loop_exit
          _
      $region47: #{reverse.1} parent=38 // pred_fallthru
        _
    $region39: #{reverse.1} parent=1 // pred_fallthru
      _
    %410 = vnop

</llo_original>
